<compile_context>
chip_gen: v7x
topology: tpu7x:2x2x1
jax: 0.10.0
libtpu: 0.0.40
codegen_flags: <defaults>
</compile_context>

<pallas_src>
import functools

import jax
import jax.numpy as jnp
from jax.experimental import pallas as pl
from jax.experimental.pallas import tpu as pltpu

HIDDEN = 1024  # fixed by the module definition


def _round_up(x, m):
    return ((x + m - 1) // m) * m


def _num_tensorcores():
    """Best-effort count of TensorCores sharing the grid (megacore split)."""
    try:
        dev = jax.devices()[0]
        n = int(getattr(dev, "num_cores", 0) or 0)
        if n >= 1:
            return n
        kind = str(getattr(dev, "device_kind", "")).lower()
        if "v4" in kind or "v5p" in kind or "v7" in kind:
            return 2
    except Exception:
        pass
    return 1


def _vmem_capacity_bytes():
    """Physical per-core VMEM; conservative fallback = v7x (64 MiB)."""
    try:
        return int(pltpu.get_tpu_info().vmem_capacity_bytes)
    except Exception:
        return 64 << 20


def adaptive_layer_kernel(x_ref, w1_ref, b1_ref, w2_ref, b2_ref, o_ref):
    # fc1 on the MXU: bf16 x bf16 -> f32 accumulate.
    x = x_ref[...].astype(jnp.bfloat16)
    h = jnp.dot(x, w1_ref[...], preferred_element_type=jnp.float32)
    h = jnp.maximum(h + b1_ref[...], 0.0)                      # f32 on the VPU
    # fc2 on the MXU (bf16 activations, f32 accumulate).
    z = jnp.dot(h.astype(jnp.bfloat16), w2_ref[...],
                preferred_element_type=jnp.float32)
    z = z + b2_ref[...]
    # Numerically stable log-softmax over the (lane-dense) last dim, in f32.
    m = jnp.max(z, axis=-1, keepdims=True)
    shifted = z - m
    lse = jnp.log(jnp.sum(jnp.exp(shifted), axis=-1, keepdims=True))
    o_ref[...] = (shifted - lse).astype(o_ref.dtype)


def _choose_tile_m(batch, num_cores):
    b8 = _round_up(batch, 8)
    # Single-TC chips (v5e/v6e): per-grid-step overhead (~0.35 us) dominates
    # at these matmul sizes, so prefer one big step (up to 512 rows).
    tile_m = min(512, b8)
    if num_cores > 1 and b8 >= 16:
        # Multi-TC (v7x-style): make sure the "parallel" batch axis has at
        # least one step per core.
        per_core = _round_up(pl.cdiv(b8, num_cores), 8)
        tile_m = min(tile_m, per_core)
    return tile_m


@functools.partial(jax.jit, static_argnames=("tile_m",))
def adaptive_layer(x, w1, b1, w2, b2, *, tile_m=None):
    """x: (B, d_in); w1: (d_in, H); b1: (H,); w2: (H, d_out); b2: (d_out,).

    Weights are stored transposed vs. PyTorch (in_features, out_features) so
    the kernel computes y = x @ W + b directly on the MXU.  x may be f32 or
    bf16; bf16 halves the streamed input traffic.
    """
    B, d_in = x.shape
    H = w1.shape[1]
    d_out = w2.shape[1]
    out_dtype = x.dtype

    num_cores = _num_tensorcores()
    vmem_cap = _vmem_capacity_bytes()

    b1 = jnp.asarray(b1, jnp.float32).reshape(1, H)
    b2 = jnp.asarray(b2, jnp.float32).reshape(1, d_out)

    # bf16 weights into the MXU (f32 accumulation inside the kernel).
    w1 = w1.astype(jnp.bfloat16)
    w2 = w2.astype(jnp.bfloat16)

    # Keep the output lane-dense: pad d_out to a multiple of 128.  Padded
    # logits get a -1e30 bias so they can never win the row max and exp()
    # underflows to 0 -> real columns' log-softmax is unchanged.  (Assumes
    # out_dtype is f32/bf16; padded columns are sliced off anyway.)
    d_out_p = _round_up(d_out, 128)
    if d_out_p != d_out:
        w2 = jnp.pad(w2, ((0, 0), (0, d_out_p - d_out)))
        b2 = jnp.pad(b2, ((0, 0), (0, d_out_p - d_out)), constant_values=-1e30)

    # Pad the batch to a multiple of tile_m (no hard assert on divisibility).
    if tile_m is None:
        tile_m = _choose_tile_m(B, num_cores)
    B_p = _round_up(B, tile_m)
    if B_p != B:
        x = jnp.pad(x, ((0, B_p - B), (0, 0)))

    grid = (B_p // tile_m,)

    x_item = jnp.dtype(x.dtype).itemsize
    out_item = jnp.dtype(out_dtype).itemsize

    cost = pl.CostEstimate(
        flops=2 * B_p * d_in * H + 2 * B_p * H * d_out_p,
        transcendentals=B_p * d_out_p,  # exp() in the softmax
        bytes_accessed=(B_p * d_in * x_item
                        + w1.size * 2 + w2.size * 2
                        + b1.size * 4 + b2.size * 4
                        + B_p * d_out_p * out_item),
    )

    # Scoped-VMEM budget:
    #   x/out tiles double-buffered, weights/biases single-buffered
    #   (Buffered(1)), + f32 hidden and logits temporaries + headroom.
    vmem_bytes = (2 * tile_m * d_in * x_item
                  + 2 * tile_m * d_out_p * out_item
                  + (d_in * H + H * d_out_p) * 2
                  + (H + d_out_p) * 4
                  + tile_m * H * 4
                  + tile_m * d_out_p * 4
                  + (2 << 20))
    # Always set the scoped limit (v5e's default is only 16 MiB); clamp to
    # the chip's physical VMEM minus headroom (v7x has only 64 MiB).
    vmem_limit = int(min(max(vmem_bytes, 16 << 20), vmem_cap - (8 << 20)))

    resident = pl.Buffered(1)  # constant index_map -> never re-fetched
    out = pl.pallas_call(
        adaptive_layer_kernel,
        out_shape=jax.ShapeDtypeStruct((B_p, d_out_p), out_dtype),
        grid_spec=pltpu.PrefetchScalarGridSpec(
            num_scalar_prefetch=0,
            grid=grid,
            in_specs=[
                pl.BlockSpec((tile_m, d_in), lambda i: (i, 0)),      # x tile
                pl.BlockSpec((d_in, H), lambda i: (0, 0),
                             pipeline_mode=resident),                # W1
                pl.BlockSpec((1, H), lambda i: (0, 0),
                             pipeline_mode=resident),                # b1
                pl.BlockSpec((H, d_out_p), lambda i: (0, 0),
                             pipeline_mode=resident),                # W2
                pl.BlockSpec((1, d_out_p), lambda i: (0, 0),
                             pipeline_mode=resident),                # b2
            ],
            out_specs=pl.BlockSpec((tile_m, d_out_p), lambda i: (i, 0)),
        ),
        compiler_params=pltpu.CompilerParams(
            dimension_semantics=("parallel",),
            vmem_limit_bytes=vmem_limit,
        ),
        cost_estimate=cost,
    )(x, w1, b1, w2, b2)

    return out[:B, :d_out]


if __name__ == "__main__":
    # Small-but-consistent shapes: batch=8, input_dim=128, hidden=1024 (fixed),
    # output_dim=128.
    B, D_IN, D_OUT = 8, 128, 128

    key = jax.random.PRNGKey(0)
    kx, k1, kb1, k2, kb2 = jax.random.split(key, 5)

    x = jax.random.normal(kx, (B, D_IN), dtype=jnp.float32)
    lim1 = 1.0 / jnp.sqrt(D_IN)
    w1 = jax.random.uniform(k1, (D_IN, HIDDEN), jnp.float32, -lim1, lim1)
    b1 = jax.random.uniform(kb1, (HIDDEN,), jnp.float32, -lim1, lim1)
    lim2 = 1.0 / jnp.sqrt(HIDDEN)
    w2 = jax.random.uniform(k2, (HIDDEN, D_OUT), jnp.float32, -lim2, lim2)
    b2 = jax.random.uniform(kb2, (D_OUT,), jnp.float32, -lim2, lim2)

    out = adaptive_layer(x, w1, b1, w2, b2)
    out = jax.block_until_ready(out)
    assert out.shape == (B, D_OUT)

    # Reference using the same bf16-into-MXU / f32-accumulate path as the
    # kernel (apples-to-apples check).
    w1b = w1.astype(jnp.bfloat16)
    w2b = w2.astype(jnp.bfloat16)
    h_ref = jnp.maximum(
        jnp.dot(x.astype(jnp.bfloat16), w1b,
                preferred_element_type=jnp.float32) + b1[None, :], 0.0)
    z_ref = jnp.dot(h_ref.astype(jnp.bfloat16), w2b,
                    preferred_element_type=jnp.float32) + b2[None, :]
    ref = jax.nn.log_softmax(z_ref, axis=-1)
    assert jnp.allclose(out, ref, atol=2e-3, rtol=2e-3), \
        float(jnp.max(jnp.abs(out - ref)))

    # Looser check against the pure-f32 PyTorch semantics (bf16 weight/act
    # rounding inside the kernel).
    h32 = jnp.maximum(x @ w1 + b1[None, :], 0.0)
    ref32 = jax.nn.log_softmax(h32 @ w2 + b2[None, :], axis=-1)
    assert jnp.allclose(out, ref32, atol=5e-2, rtol=5e-2)

    print("KERNEL_OK")
</pallas_src>

<mosaic_0001>
module attributes {stable_mosaic.version = 11 : i64} {
  func.func @adaptive_layer_kernel(%arg0: i32, %arg1: memref<8x128xf32, #tpu.memory_space<vmem>>, %arg2: memref<128x1024xbf16, #tpu.memory_space<vmem>>, %arg3: memref<1x1024xf32, #tpu.memory_space<vmem>>, %arg4: memref<1024x128xbf16, #tpu.memory_space<vmem>>, %arg5: memref<1x128xf32, #tpu.memory_space<vmem>>, %arg6: memref<8x128xf32, #tpu.memory_space<vmem>>) attributes {dimension_semantics = [#tpu.dimension_semantics<parallel>], iteration_bounds = array<i64: 1>, scalar_prefetch = 0 : i64, scratch_operands = 0 : i64, tpu.core_type = #tpu.core_type<tc>, window_params = [{transform_indices = @transform_0, window_bounds = array<i64: 8, 128>}, {pipeline_mode = #tpu.pipeline_mode<synchronous>, transform_indices = @transform_1, window_bounds = array<i64: 128, 1024>}, {pipeline_mode = #tpu.pipeline_mode<synchronous>, transform_indices = @transform_2, window_bounds = array<i64: 1, 1024>}, {pipeline_mode = #tpu.pipeline_mode<synchronous>, transform_indices = @transform_3, window_bounds = array<i64: 1024, 128>}, {pipeline_mode = #tpu.pipeline_mode<synchronous>, transform_indices = @transform_4, window_bounds = array<i64: 1, 128>}, {transform_indices = @transform_5, window_bounds = array<i64: 8, 128>}]} {
    %c0 = arith.constant 0 : index
    %c0_0 = arith.constant 0 : index
    %0 = vector.load %arg1[%c0, %c0_0] : memref<8x128xf32, #tpu.memory_space<vmem>>, vector<8x128xf32>
    %1 = arith.truncf %0 : vector<8x128xf32> to vector<8x128xbf16>
    %c0_1 = arith.constant 0 : index
    %c0_2 = arith.constant 0 : index
    %2 = vector.load %arg2[%c0_1, %c0_2] : memref<128x1024xbf16, #tpu.memory_space<vmem>>, vector<128x1024xbf16>
    %cst = arith.constant dense<0.000000e+00> : vector<8x1024xf32>
    %3 = tpu.matmul %1, %2, %cst {dimension_numbers = #tpu.dot_dimension_numbers<[1], [0], [0], [1], [0, 0, 1, 1], [], []>} : vector<8x128xbf16>, vector<128x1024xbf16>, vector<8x1024xf32> -> vector<8x1024xf32>
    %c0_3 = arith.constant 0 : index
    %c0_4 = arith.constant 0 : index
    %4 = vector.load %arg3[%c0_3, %c0_4] : memref<1x1024xf32, #tpu.memory_space<vmem>>, vector<1x1024xf32>
    %5 = vector.broadcast %4 : vector<1x1024xf32> to vector<8x1024xf32>
    %6 = arith.addf %3, %5 : vector<8x1024xf32>
    %cst_5 = arith.constant 0.000000e+00 : f32
    %7 = vector.broadcast %cst_5 : f32 to vector<8x1024xf32>
    %8 = arith.maximumf %6, %7 : vector<8x1024xf32>
    %9 = arith.truncf %8 : vector<8x1024xf32> to vector<8x1024xbf16>
    %c0_6 = arith.constant 0 : index
    %c0_7 = arith.constant 0 : index
    %10 = vector.load %arg4[%c0_6, %c0_7] : memref<1024x128xbf16, #tpu.memory_space<vmem>>, vector<1024x128xbf16>
    %cst_8 = arith.constant dense<0.000000e+00> : vector<8x128xf32>
    %11 = tpu.matmul %9, %10, %cst_8 {dimension_numbers = #tpu.dot_dimension_numbers<[1], [0], [0], [1], [0, 0, 1, 1], [], []>} : vector<8x1024xbf16>, vector<1024x128xbf16>, vector<8x128xf32> -> vector<8x128xf32>
    %c0_9 = arith.constant 0 : index
    %c0_10 = arith.constant 0 : index
    %12 = vector.load %arg5[%c0_9, %c0_10] : memref<1x128xf32, #tpu.memory_space<vmem>>, vector<1x128xf32>
    %13 = vector.broadcast %12 : vector<1x128xf32> to vector<8x128xf32>
    %14 = arith.addf %11, %13 : vector<8x128xf32>
    %cst_11 = arith.constant dense<0xFF800000> : vector<8xf32>
    %15 = vector.multi_reduction <maximumf>, %14, %cst_11 [1] : vector<8x128xf32> to vector<8xf32>
    %16 = vector.shape_cast %15 : vector<8xf32> to vector<8x1xf32>
    %17 = vector.broadcast %16 : vector<8x1xf32> to vector<8x128xf32>
    %18 = arith.subf %14, %17 : vector<8x128xf32>
    %19 = math.exp %18 : vector<8x128xf32>
    %cst_12 = arith.constant dense<0.000000e+00> : vector<8xf32>
    %20 = vector.multi_reduction <add>, %19, %cst_12 [1] : vector<8x128xf32> to vector<8xf32>
    %21 = vector.shape_cast %20 : vector<8xf32> to vector<8x1xf32>
    %22 = math.log %21 : vector<8x1xf32>
    %23 = vector.broadcast %22 : vector<8x1xf32> to vector<8x128xf32>
    %24 = arith.subf %18, %23 : vector<8x128xf32>
    %c0_13 = arith.constant 0 : index
    %c0_14 = arith.constant 0 : index
    %25 = vector.load %arg6[%c0_13, %c0_14] : memref<8x128xf32, #tpu.memory_space<vmem>>, vector<8x128xf32>
    tpu.vector_store %arg6[%c0_13, %c0_14], %24 {strides = array<i32>} : memref<8x128xf32, #tpu.memory_space<vmem>>, vector<8x128xf32>,
    return
  }
  func.func @transform_0(%arg0: i32) -> (i32, i32) {
    %c0_i32 = arith.constant 0 : i32
    %c0_i32_0 = arith.constant 0 : i32
    return %arg0, %c0_i32 : i32, i32
  }
  func.func @transform_1(%arg0: i32) -> (i32, i32) {
    %c0_i32 = arith.constant 0 : i32
    %c0_i32_0 = arith.constant 0 : i32
    %c0_i32_1 = arith.constant 0 : i32
    return %c0_i32, %c0_i32_0 : i32, i32
  }
  func.func @transform_2(%arg0: i32) -> (i32, i32) {
    %c0_i32 = arith.constant 0 : i32
    %c0_i32_0 = arith.constant 0 : i32
    %c0_i32_1 = arith.constant 0 : i32
    return %c0_i32, %c0_i32_0 : i32, i32
  }
  func.func @transform_3(%arg0: i32) -> (i32, i32) {
    %c0_i32 = arith.constant 0 : i32
    %c0_i32_0 = arith.constant 0 : i32
    %c0_i32_1 = arith.constant 0 : i32
    return %c0_i32, %c0_i32_0 : i32, i32
  }
  func.func @transform_4(%arg0: i32) -> (i32, i32) {
    %c0_i32 = arith.constant 0 : i32
    %c0_i32_0 = arith.constant 0 : i32
    %c0_i32_1 = arith.constant 0 : i32
    return %c0_i32, %c0_i32_0 : i32, i32
  }
  func.func @transform_5(%arg0: i32) -> (i32, i32) {
    %c0_i32 = arith.constant 0 : i32
    %c0_i32_0 = arith.constant 0 : i32
    return %arg0, %c0_i32 : i32, i32
  }
}

</mosaic_0001>

<llo_original>
// kernel: adaptive_layer.1
$region0: #{adaptive_layer.1}
  #allocation0 [shape = 'u32[]', space=smem, size = 0x4, offset = 0x4, fixed_abs, tag = 'smem constant byte address 0x4 - core index']
  #allocation1 [shape = 'u32[144,128]{1,0:T(1,128)}', space=vmem, size = 0x12000, scoped, tag = 'internal scratch']
  %s0 = inlined_call_operand.vmem [shape: f32[8,128], index: 0, kind: input, shape index: {}]
  %s1 = inlined_call_operand.vmem [shape: bf16[128,1024], index: 1, kind: input, shape index: {}]
  %s2 = inlined_call_operand.vmem [shape: f32[1,1024], index: 2, kind: input, shape index: {}]
  %s3 = inlined_call_operand.vmem [shape: bf16[1024,128], index: 3, kind: input, shape index: {}]
  %s4 = inlined_call_operand.vmem [shape: f32[1,128], index: 4, kind: input, shape index: {}]
  %s5 = inlined_call_operand.hbm [shape: f32[8,128], index: 5, kind: output, shape index: {}]
  %s6 = sld [smem:[#allocation0]]
  $region30: #{adaptive_layer.1} parent=0
    _
  %s8 = ssub.s32 1, %s6
  %s9 = scalar_select 0, %s8, %s6
  $region1: #{adaptive_layer.1} parent=0
    #allocation2 [shape = 'u8[4096]{0}', space=vmem, size = 0x1000, scoped, tag = 'output window, operand 0, single buffered']
    #allocation3 [shape = 's32[1]{0}', space=sflag, size = 0x4, scoped, tag = 'scoped memory for adaptive_layer.1']
    %10 = vsyncpa [#allocation3], 0
    // Predicated region
    $region2: #{adaptive_layer.1} parent=1 // pred_check
      _
    $region3: #{adaptive_layer.1} parent=1 // pred_check_branch
      %12 = sbr.rel (0) target = $region5
    $region4: #{adaptive_layer.1} parent=1 // pred_region
      _
    $region5: #{adaptive_layer.1} parent=1 // pred_fallthru
      _
    // Predicated region
    $region6: #{adaptive_layer.1} parent=1 // pred_check
      _
    $region7: #{adaptive_layer.1} parent=1 // pred_check_branch
      %14 = sbr.rel (0) target = $region9
    $region8: #{adaptive_layer.1} parent=1 // pred_region
      _
    $region9: #{adaptive_layer.1} parent=1 // pred_fallthru
      _
    // Predicated region
    $region10: #{adaptive_layer.1} parent=1 // pred_check
      _
    $region11: #{adaptive_layer.1} parent=1 // pred_check_branch
      %16 = sbr.rel (0) target = $region13
    $region12: #{adaptive_layer.1} parent=1 // pred_region
      _
    $region13: #{adaptive_layer.1} parent=1 // pred_fallthru
      _
    // Predicated region
    $region14: #{adaptive_layer.1} parent=1 // pred_check
      _
    $region15: #{adaptive_layer.1} parent=1 // pred_check_branch
      %18 = sbr.rel (0) target = $region17
    $region16: #{adaptive_layer.1} parent=1 // pred_region
      _
    $region17: #{adaptive_layer.1} parent=1 // pred_fallthru
      _
    // Predicated region
    $region18: #{adaptive_layer.1} parent=1 // pred_check
      _
    $region19: #{adaptive_layer.1} parent=1 // pred_check_branch
      %20 = sbr.rel (0) target = $region21
    $region20: #{adaptive_layer.1} parent=1 // pred_region
      _
    $region21: #{adaptive_layer.1} parent=1 // pred_fallthru
      _
    %v22 = vld [vmem:[%s0] sm:$0xff]
    %v23 = vpack.c.bf16 %v22, %v22
    %v24 = vld [vmem:[%s1] sm:$0xff]
    %v25 = vld [vmem:[%s1 + $0x8] sm:$0xff]
    %v26 = vld [vmem:[%s1 + $0x10] sm:$0xff]
    %v27 = vld [vmem:[%s1 + $0x18] sm:$0xff]
    %v28 = vld [vmem:[%s1 + $0x20] sm:$0xff]
    %v29 = vld [vmem:[%s1 + $0x28] sm:$0xff]
    %v30 = vld [vmem:[%s1 + $0x30] sm:$0xff]
    %v31 = vld [vmem:[%s1 + $0x38] sm:$0xff]
    %v32 = vld [vmem:[%s1 + $0x40] sm:$0xff]
    %v33 = vld [vmem:[%s1 + $0x48] sm:$0xff]
    %v34 = vld [vmem:[%s1 + $0x50] sm:$0xff]
    %v35 = vld [vmem:[%s1 + $0x58] sm:$0xff]
    %v36 = vld [vmem:[%s1 + $0x60] sm:$0xff]
    %v37 = vld [vmem:[%s1 + $0x68] sm:$0xff]
    %v38 = vld [vmem:[%s1 + $0x70] sm:$0xff]
    %v39 = vld [vmem:[%s1 + $0x78] sm:$0xff]
    %v40 = vld [vmem:[%s1 + $0x80] sm:$0xff]
    %v41 = vld [vmem:[%s1 + $0x88] sm:$0xff]
    %v42 = vld [vmem:[%s1 + $0x90] sm:$0xff]
    %v43 = vld [vmem:[%s1 + $0x98] sm:$0xff]
    %v44 = vld [vmem:[%s1 + $0xa0] sm:$0xff]
    %v45 = vld [vmem:[%s1 + $0xa8] sm:$0xff]
    %v46 = vld [vmem:[%s1 + $0xb0] sm:$0xff]
    %v47 = vld [vmem:[%s1 + $0xb8] sm:$0xff]
    %v48 = vld [vmem:[%s1 + $0xc0] sm:$0xff]
    %v49 = vld [vmem:[%s1 + $0xc8] sm:$0xff]
    %v50 = vld [vmem:[%s1 + $0xd0] sm:$0xff]
    %v51 = vld [vmem:[%s1 + $0xd8] sm:$0xff]
    %v52 = vld [vmem:[%s1 + $0xe0] sm:$0xff]
    %v53 = vld [vmem:[%s1 + $0xe8] sm:$0xff]
    %v54 = vld [vmem:[%s1 + $0xf0] sm:$0xff]
    %v55 = vld [vmem:[%s1 + $0xf8] sm:$0xff]
    %v56 = vld [vmem:[%s1 + $0x100] sm:$0xff]
    %v57 = vld [vmem:[%s1 + $0x108] sm:$0xff]
    %v58 = vld [vmem:[%s1 + $0x110] sm:$0xff]
    %v59 = vld [vmem:[%s1 + $0x118] sm:$0xff]
    %v60 = vld [vmem:[%s1 + $0x120] sm:$0xff]
    %v61 = vld [vmem:[%s1 + $0x128] sm:$0xff]
    %v62 = vld [vmem:[%s1 + $0x130] sm:$0xff]
    %v63 = vld [vmem:[%s1 + $0x138] sm:$0xff]
    %v64 = vld [vmem:[%s1 + $0x140] sm:$0xff]
    %v65 = vld [vmem:[%s1 + $0x148] sm:$0xff]
    %v66 = vld [vmem:[%s1 + $0x150] sm:$0xff]
    %v67 = vld [vmem:[%s1 + $0x158] sm:$0xff]
    %v68 = vld [vmem:[%s1 + $0x160] sm:$0xff]
    %v69 = vld [vmem:[%s1 + $0x168] sm:$0xff]
    %v70 = vld [vmem:[%s1 + $0x170] sm:$0xff]
    %v71 = vld [vmem:[%s1 + $0x178] sm:$0xff]
    %v72 = vld [vmem:[%s1 + $0x180] sm:$0xff]
    %v73 = vld [vmem:[%s1 + $0x188] sm:$0xff]
    %v74 = vld [vmem:[%s1 + $0x190] sm:$0xff]
    %v75 = vld [vmem:[%s1 + $0x198] sm:$0xff]
    %v76 = vld [vmem:[%s1 + $0x1a0] sm:$0xff]
    %v77 = vld [vmem:[%s1 + $0x1a8] sm:$0xff]
    %v78 = vld [vmem:[%s1 + $0x1b0] sm:$0xff]
    %v79 = vld [vmem:[%s1 + $0x1b8] sm:$0xff]
    %v80 = vld [vmem:[%s1 + $0x1c0] sm:$0xff]
    %v81 = vld [vmem:[%s1 + $0x1c8] sm:$0xff]
    %v82 = vld [vmem:[%s1 + $0x1d0] sm:$0xff]
    %v83 = vld [vmem:[%s1 + $0x1d8] sm:$0xff]
    %v84 = vld [vmem:[%s1 + $0x1e0] sm:$0xff]
    %v85 = vld [vmem:[%s1 + $0x1e8] sm:$0xff]
    %v86 = vld [vmem:[%s1 + $0x1f0] sm:$0xff]
    %v87 = vld [vmem:[%s1 + $0x1f8] sm:$0xff]
    %v88 = vld [vmem:[%s2] sm:$0xff]
    %v90 = vlaneseq
    %v91 = vshrl.u32 %v90, 7
    %v92 = vsub.s32 0, %v91
    %v93 = vrot.slane %v88, %v92
    %v94 = vlaneseq
    %v95 = vshrl.u32 %v94, 7
    %v96 = vsub.s32 1, %v95
    %v97 = vrot.slane %v88, %v96
    %v98 = vlaneseq
    %v99 = vshrl.u32 %v98, 7
    %v100 = vsub.s32 2, %v99
    %v101 = vrot.slane %v88, %v100
    %v102 = vlaneseq
    %v103 = vshrl.u32 %v102, 7
    %v104 = vsub.s32 3, %v103
    %v105 = vrot.slane %v88, %v104
    %v106 = vlaneseq
    %v107 = vshrl.u32 %v106, 7
    %v108 = vsub.s32 4, %v107
    %v109 = vrot.slane %v88, %v108
    %v110 = vlaneseq
    %v111 = vshrl.u32 %v110, 7
    %v112 = vsub.s32 5, %v111
    %v113 = vrot.slane %v88, %v112
    %v114 = vlaneseq
    %v115 = vshrl.u32 %v114, 7
    %v116 = vsub.s32 6, %v115
    %v117 = vrot.slane %v88, %v116
    %v118 = vlaneseq
    %v119 = vshrl.u32 %v118, 7
    %v120 = vsub.s32 7, %v119
    %v121 = vrot.slane %v88, %v120
    %v194 = vunpack.c.l.b16 %v24
    %v195 = vunpack.c.h.b16 %v24
    %v196 = vunpack.c.l.b16 %v25
    %v197 = vunpack.c.h.b16 %v25
    %v198 = vunpack.c.l.b16 %v26
    %v199 = vunpack.c.h.b16 %v26
    %v200 = vunpack.c.l.b16 %v27
    %v201 = vunpack.c.h.b16 %v27
    %v202 = vunpack.c.l.b16 %v28
    %v203 = vunpack.c.h.b16 %v28
    %v204 = vunpack.c.l.b16 %v29
    %v205 = vunpack.c.h.b16 %v29
    %v206 = vunpack.c.l.b16 %v30
    %v207 = vunpack.c.h.b16 %v30
    %v208 = vunpack.c.l.b16 %v31
    %v209 = vunpack.c.h.b16 %v31
    %v210 = vunpack.c.l.b16 %v32
    %v211 = vunpack.c.h.b16 %v32
    %v212 = vunpack.c.l.b16 %v33
    %v213 = vunpack.c.h.b16 %v33
    %v214 = vunpack.c.l.b16 %v34
    %v215 = vunpack.c.h.b16 %v34
    %v216 = vunpack.c.l.b16 %v35
    %v217 = vunpack.c.h.b16 %v35
    %v218 = vunpack.c.l.b16 %v36
    %v219 = vunpack.c.h.b16 %v36
    %v220 = vunpack.c.l.b16 %v37
    %v221 = vunpack.c.h.b16 %v37
    %v222 = vunpack.c.l.b16 %v38
    %v223 = vunpack.c.h.b16 %v38
    %v224 = vunpack.c.l.b16 %v39
    %v225 = vunpack.c.h.b16 %v39
    %v226 = vunpack.c.l.b16 %v40
    %v227 = vunpack.c.h.b16 %v40
    %v228 = vunpack.c.l.b16 %v41
    %v229 = vunpack.c.h.b16 %v41
    %v230 = vunpack.c.l.b16 %v42
    %v231 = vunpack.c.h.b16 %v42
    %v232 = vunpack.c.l.b16 %v43
    %v233 = vunpack.c.h.b16 %v43
    %v234 = vunpack.c.l.b16 %v44
    %v235 = vunpack.c.h.b16 %v44
    %v236 = vunpack.c.l.b16 %v45
    %v237 = vunpack.c.h.b16 %v45
    %v238 = vunpack.c.l.b16 %v46
    %v239 = vunpack.c.h.b16 %v46
    %v240 = vunpack.c.l.b16 %v47
    %v241 = vunpack.c.h.b16 %v47
    %v242 = vunpack.c.l.b16 %v48
    %v243 = vunpack.c.h.b16 %v48
    %v244 = vunpack.c.l.b16 %v49
    %v245 = vunpack.c.h.b16 %v49
    %v246 = vunpack.c.l.b16 %v50
    %v247 = vunpack.c.h.b16 %v50
    %v248 = vunpack.c.l.b16 %v51
    %v249 = vunpack.c.h.b16 %v51
    %v250 = vunpack.c.l.b16 %v52
    %v251 = vunpack.c.h.b16 %v52
    %v252 = vunpack.c.l.b16 %v53
    %v253 = vunpack.c.h.b16 %v53
    %v254 = vunpack.c.l.b16 %v54
    %v255 = vunpack.c.h.b16 %v54
    %v256 = vunpack.c.l.b16 %v55
    %v257 = vunpack.c.h.b16 %v55
    %v258 = vunpack.c.l.b16 %v56
    %v259 = vunpack.c.h.b16 %v56
    %v260 = vunpack.c.l.b16 %v57
    %v261 = vunpack.c.h.b16 %v57
    %v262 = vunpack.c.l.b16 %v58
    %v263 = vunpack.c.h.b16 %v58
    %v264 = vunpack.c.l.b16 %v59
    %v265 = vunpack.c.h.b16 %v59
    %v266 = vunpack.c.l.b16 %v60
    %v267 = vunpack.c.h.b16 %v60
    %v268 = vunpack.c.l.b16 %v61
    %v269 = vunpack.c.h.b16 %v61
    %v270 = vunpack.c.l.b16 %v62
    %v271 = vunpack.c.h.b16 %v62
    %v272 = vunpack.c.l.b16 %v63
    %v273 = vunpack.c.h.b16 %v63
    %v274 = vunpack.c.l.b16 %v64
    %v275 = vunpack.c.h.b16 %v64
    %v276 = vunpack.c.l.b16 %v65
    %v277 = vunpack.c.h.b16 %v65
    %v278 = vunpack.c.l.b16 %v66
    %v279 = vunpack.c.h.b16 %v66
    %v280 = vunpack.c.l.b16 %v67
    %v281 = vunpack.c.h.b16 %v67
    %v282 = vunpack.c.l.b16 %v68
    %v283 = vunpack.c.h.b16 %v68
    %v284 = vunpack.c.l.b16 %v69
    %v285 = vunpack.c.h.b16 %v69
    %v286 = vunpack.c.l.b16 %v70
    %v287 = vunpack.c.h.b16 %v70
    %v288 = vunpack.c.l.b16 %v71
    %v289 = vunpack.c.h.b16 %v71
    %v290 = vunpack.c.l.b16 %v72
    %v291 = vunpack.c.h.b16 %v72
    %v292 = vunpack.c.l.b16 %v73
    %v293 = vunpack.c.h.b16 %v73
    %v294 = vunpack.c.l.b16 %v74
    %v295 = vunpack.c.h.b16 %v74
    %v296 = vunpack.c.l.b16 %v75
    %v297 = vunpack.c.h.b16 %v75
    %v298 = vunpack.c.l.b16 %v76
    %v299 = vunpack.c.h.b16 %v76
    %v300 = vunpack.c.l.b16 %v77
    %v301 = vunpack.c.h.b16 %v77
    %v302 = vunpack.c.l.b16 %v78
    %v303 = vunpack.c.h.b16 %v78
    %v304 = vunpack.c.l.b16 %v79
    %v305 = vunpack.c.h.b16 %v79
    %v306 = vunpack.c.l.b16 %v80
    %v307 = vunpack.c.h.b16 %v80
    %v308 = vunpack.c.l.b16 %v81
    %v309 = vunpack.c.h.b16 %v81
    %v310 = vunpack.c.l.b16 %v82
    %v311 = vunpack.c.h.b16 %v82
    %v312 = vunpack.c.l.b16 %v83
    %v313 = vunpack.c.h.b16 %v83
    %v314 = vunpack.c.l.b16 %v84
    %v315 = vunpack.c.h.b16 %v84
    %v316 = vunpack.c.l.b16 %v85
    %v317 = vunpack.c.h.b16 %v85
    %v318 = vunpack.c.l.b16 %v86
    %v319 = vunpack.c.h.b16 %v86
    %v320 = vunpack.c.l.b16 %v87
    %v321 = vunpack.c.h.b16 %v87
    %v322 = vpack.c.b16 %v202, %v194
    %v323 = vpack.c.b16 %v203, %v195
    %v324 = vpack.c.b16 %v204, %v196
    %v325 = vpack.c.b16 %v205, %v197
    %v326 = vpack.c.b16 %v206, %v198
    %v327 = vpack.c.b16 %v207, %v199
    %v328 = vpack.c.b16 %v208, %v200
    %v329 = vpack.c.b16 %v209, %v201
    %v330 = vpack.c.b16 %v218, %v210
    %v331 = vpack.c.b16 %v219, %v211
    %v332 = vpack.c.b16 %v220, %v212
    %v333 = vpack.c.b16 %v221, %v213
    %v334 = vpack.c.b16 %v222, %v214
    %v335 = vpack.c.b16 %v223, %v215
    %v336 = vpack.c.b16 %v224, %v216
    %v337 = vpack.c.b16 %v225, %v217
    %v338 = vpack.c.b16 %v234, %v226
    %v339 = vpack.c.b16 %v235, %v227
    %v340 = vpack.c.b16 %v236, %v228
    %v341 = vpack.c.b16 %v237, %v229
    %v342 = vpack.c.b16 %v238, %v230
    %v343 = vpack.c.b16 %v239, %v231
    %v344 = vpack.c.b16 %v240, %v232
    %v345 = vpack.c.b16 %v241, %v233
    %v346 = vpack.c.b16 %v250, %v242
    %v347 = vpack.c.b16 %v251, %v243
    %v348 = vpack.c.b16 %v252, %v244
    %v349 = vpack.c.b16 %v253, %v245
    %v350 = vpack.c.b16 %v254, %v246
    %v351 = vpack.c.b16 %v255, %v247
    %v352 = vpack.c.b16 %v256, %v248
    %v353 = vpack.c.b16 %v257, %v249
    %v354 = vpack.c.b16 %v266, %v258
    %v355 = vpack.c.b16 %v267, %v259
    %v356 = vpack.c.b16 %v268, %v260
    %v357 = vpack.c.b16 %v269, %v261
    %v358 = vpack.c.b16 %v270, %v262
    %v359 = vpack.c.b16 %v271, %v263
    %v360 = vpack.c.b16 %v272, %v264
    %v361 = vpack.c.b16 %v273, %v265
    %v362 = vpack.c.b16 %v282, %v274
    %v363 = vpack.c.b16 %v283, %v275
    %v364 = vpack.c.b16 %v284, %v276
    %v365 = vpack.c.b16 %v285, %v277
    %v366 = vpack.c.b16 %v286, %v278
    %v367 = vpack.c.b16 %v287, %v279
    %v368 = vpack.c.b16 %v288, %v280
    %v369 = vpack.c.b16 %v289, %v281
    %v370 = vpack.c.b16 %v298, %v290
    %v371 = vpack.c.b16 %v299, %v291
    %v372 = vpack.c.b16 %v300, %v292
    %v373 = vpack.c.b16 %v301, %v293
    %v374 = vpack.c.b16 %v302, %v294
    %v375 = vpack.c.b16 %v303, %v295
    %v376 = vpack.c.b16 %v304, %v296
    %v377 = vpack.c.b16 %v305, %v297
    %v378 = vpack.c.b16 %v314, %v306
    %v379 = vpack.c.b16 %v315, %v307
    %v380 = vpack.c.b16 %v316, %v308
    %v381 = vpack.c.b16 %v317, %v309
    %v382 = vpack.c.b16 %v318, %v310
    %v383 = vpack.c.b16 %v319, %v311
    %v384 = vpack.c.b16 %v320, %v312
    %v385 = vpack.c.b16 %v321, %v313
    %450 = vmatprep.subr.bf16.mxu0 %v323
    %451 = vmatpush1.bf16.msra.mxu0 %v322
    %452 = vmatprep.subr.bf16.mxu0 %v331
    %453 = vmatpush1.bf16.msra.mxu0 %v330
    %454 = vmatprep.subr.bf16.mxu0 %v339
    %455 = vmatpush1.bf16.msra.mxu0 %v338
    %456 = vmatprep.subr.bf16.mxu0 %v347
    %457 = vmatpush1.bf16.msra.mxu0 %v346
    %458 = vmatprep.subr.bf16.mxu0 %v355
    %459 = vmatpush1.bf16.msra.mxu0 %v354
    %460 = vmatprep.subr.bf16.mxu0 %v363
    %461 = vmatpush1.bf16.msra.mxu0 %v362
    %462 = vmatprep.subr.bf16.mxu0 %v371
    %463 = vmatpush1.bf16.msra.mxu0 %v370
    %464 = vmatprep.subr.bf16.mxu0 %v379
    %465 = vmatpush1.bf16.msra.mxu0 %v378
    %466 = vmatprep.subr.bf16.mxu0 0
    %467 = vmatpush1.bf16.msra.mxu0 0
    %468 = vmatprep.subr.bf16.mxu0 0
    %469 = vmatpush1.bf16.msra.mxu0 0
    %470 = vmatprep.subr.bf16.mxu0 0
    %471 = vmatpush1.bf16.msra.mxu0 0
    %472 = vmatprep.subr.bf16.mxu0 0
    %473 = vmatpush1.bf16.msra.mxu0 0
    %474 = vmatprep.subr.bf16.mxu0 0
    %475 = vmatpush1.bf16.msra.mxu0 0
    %476 = vmatprep.subr.bf16.mxu0 0
    %477 = vmatpush1.bf16.msra.mxu0 0
    %478 = vmatprep.subr.bf16.mxu0 0
    %479 = vmatpush1.bf16.msra.mxu0 0
    %480 = vmatprep.subr.bf16.mxu0 0
    %481 = vmatpush1.bf16.msra.mxu0 0
    %482 = vmatprep.mubr.bf16.mxu0 0
    %483 = vmatmul.mubr.bf16.gmra.mrb[0].mxu0 %v23
    %v484 = vpop.f32.mrb[0].mxu0
    %v485 = vadd.f32 %v93, %v484
    %v486 = vpop.f32.mrb[0].mxu0
    %v487 = vadd.f32 %v97, %v486
    %v488 = vpop.f32.mrb[0].mxu0
    %v489 = vpop.f32.mrb[0].mxu0
    %490 = vdwg.mxu0
    %491 = vmatprep.subr.bf16.mxu0 %v325
    %492 = vmatpush1.bf16.msra.mxu0 %v324
    %493 = vmatprep.subr.bf16.mxu0 %v333
    %494 = vmatpush1.bf16.msra.mxu0 %v332
    %495 = vmatprep.subr.bf16.mxu0 %v341
    %496 = vmatpush1.bf16.msra.mxu0 %v340
    %497 = vmatprep.subr.bf16.mxu0 %v349
    %498 = vmatpush1.bf16.msra.mxu0 %v348
    %499 = vmatprep.subr.bf16.mxu0 %v357
    %500 = vmatpush1.bf16.msra.mxu0 %v356
    %501 = vmatprep.subr.bf16.mxu0 %v365
    %502 = vmatpush1.bf16.msra.mxu0 %v364
    %503 = vmatprep.subr.bf16.mxu0 %v373
    %504 = vmatpush1.bf16.msra.mxu0 %v372
    %505 = vmatprep.subr.bf16.mxu0 %v381
    %506 = vmatpush1.bf16.msra.mxu0 %v380
    %507 = vmatprep.subr.bf16.mxu0 0
    %508 = vmatpush1.bf16.msra.mxu0 0
    %509 = vmatprep.subr.bf16.mxu0 0
    %510 = vmatpush1.bf16.msra.mxu0 0
    %511 = vmatprep.subr.bf16.mxu0 0
    %512 = vmatpush1.bf16.msra.mxu0 0
    %513 = vmatprep.subr.bf16.mxu0 0
    %514 = vmatpush1.bf16.msra.mxu0 0
    %515 = vmatprep.subr.bf16.mxu0 0
    %516 = vmatpush1.bf16.msra.mxu0 0
    %517 = vmatprep.subr.bf16.mxu0 0
    %518 = vmatpush1.bf16.msra.mxu0 0
    %519 = vmatprep.subr.bf16.mxu0 0
    %520 = vmatpush1.bf16.msra.mxu0 0
    %521 = vmatprep.subr.bf16.mxu0 0
    %522 = vmatpush1.bf16.msra.mxu0 0
    %523 = vmatprep.mubr.bf16.mxu0 0
    %524 = vmatmul.mubr.bf16.gmra.mrb[0].mxu0 %v23
    %v525 = vpop.f32.mrb[0].mxu0
    %v526 = vadd.f32 %v101, %v525
    %v527 = vpop.f32.mrb[0].mxu0
    %v528 = vadd.f32 %v105, %v527
    %v529 = vpop.f32.mrb[0].mxu0
    %v530 = vpop.f32.mrb[0].mxu0
    %531 = vdwg.mxu0
    %532 = vmatprep.subr.bf16.mxu0 %v327
    %533 = vmatpush1.bf16.msra.mxu0 %v326
    %534 = vmatprep.subr.bf16.mxu0 %v335
    %535 = vmatpush1.bf16.msra.mxu0 %v334
    %536 = vmatprep.subr.bf16.mxu0 %v343
    %537 = vmatpush1.bf16.msra.mxu0 %v342
    %538 = vmatprep.subr.bf16.mxu0 %v351
    %539 = vmatpush1.bf16.msra.mxu0 %v350
    %540 = vmatprep.subr.bf16.mxu0 %v359
    %541 = vmatpush1.bf16.msra.mxu0 %v358
    %542 = vmatprep.subr.bf16.mxu0 %v367
    %543 = vmatpush1.bf16.msra.mxu0 %v366
    %544 = vmatprep.subr.bf16.mxu0 %v375
    %545 = vmatpush1.bf16.msra.mxu0 %v374
    %546 = vmatprep.subr.bf16.mxu0 %v383
    %547 = vmatpush1.bf16.msra.mxu0 %v382
    %548 = vmatprep.subr.bf16.mxu0 0
    %549 = vmatpush1.bf16.msra.mxu0 0
    %550 = vmatprep.subr.bf16.mxu0 0
    %551 = vmatpush1.bf16.msra.mxu0 0
    %552 = vmatprep.subr.bf16.mxu0 0
    %553 = vmatpush1.bf16.msra.mxu0 0
    %554 = vmatprep.subr.bf16.mxu0 0
    %555 = vmatpush1.bf16.msra.mxu0 0
    %556 = vmatprep.subr.bf16.mxu0 0
    %557 = vmatpush1.bf16.msra.mxu0 0
    %558 = vmatprep.subr.bf16.mxu0 0
    %559 = vmatpush1.bf16.msra.mxu0 0
    %560 = vmatprep.subr.bf16.mxu0 0
    %561 = vmatpush1.bf16.msra.mxu0 0
    %562 = vmatprep.subr.bf16.mxu0 0
    %563 = vmatpush1.bf16.msra.mxu0 0
    %564 = vmatprep.mubr.bf16.mxu0 0
    %565 = vmatmul.mubr.bf16.gmra.mrb[0].mxu0 %v23
    %v566 = vpop.f32.mrb[0].mxu0
    %v567 = vadd.f32 %v109, %v566
    %v568 = vpop.f32.mrb[0].mxu0
    %v569 = vadd.f32 %v113, %v568
    %v570 = vpop.f32.mrb[0].mxu0
    %v571 = vpop.f32.mrb[0].mxu0
    %572 = vdwg.mxu0
    %573 = vmatprep.subr.bf16.mxu0 %v329
    %574 = vmatpush1.bf16.msra.mxu0 %v328
    %575 = vmatprep.subr.bf16.mxu0 %v337
    %576 = vmatpush1.bf16.msra.mxu0 %v336
    %577 = vmatprep.subr.bf16.mxu0 %v345
    %578 = vmatpush1.bf16.msra.mxu0 %v344
    %579 = vmatprep.subr.bf16.mxu0 %v353
    %580 = vmatpush1.bf16.msra.mxu0 %v352
    %581 = vmatprep.subr.bf16.mxu0 %v361
    %582 = vmatpush1.bf16.msra.mxu0 %v360
    %583 = vmatprep.subr.bf16.mxu0 %v369
    %584 = vmatpush1.bf16.msra.mxu0 %v368
    %585 = vmatprep.subr.bf16.mxu0 %v377
    %586 = vmatpush1.bf16.msra.mxu0 %v376
    %587 = vmatprep.subr.bf16.mxu0 %v385
    %588 = vmatpush1.bf16.msra.mxu0 %v384
    %589 = vmatprep.subr.bf16.mxu0 0
    %590 = vmatpush1.bf16.msra.mxu0 0
    %591 = vmatprep.subr.bf16.mxu0 0
    %592 = vmatpush1.bf16.msra.mxu0 0
    %593 = vmatprep.subr.bf16.mxu0 0
    %594 = vmatpush1.bf16.msra.mxu0 0
    %595 = vmatprep.subr.bf16.mxu0 0
    %596 = vmatpush1.bf16.msra.mxu0 0
    %597 = vmatprep.subr.bf16.mxu0 0
    %598 = vmatpush1.bf16.msra.mxu0 0
    %599 = vmatprep.subr.bf16.mxu0 0
    %600 = vmatpush1.bf16.msra.mxu0 0
    %601 = vmatprep.subr.bf16.mxu0 0
    %602 = vmatpush1.bf16.msra.mxu0 0
    %603 = vmatprep.subr.bf16.mxu0 0
    %604 = vmatpush1.bf16.msra.mxu0 0
    %605 = vmatprep.mubr.bf16.mxu0 0
    %606 = vmatmul.mubr.bf16.gmra.mrb[0].mxu0 %v23
    %v607 = vpop.f32.mrb[0].mxu0
    %v608 = vadd.f32 %v117, %v607
    %v609 = vpop.f32.mrb[0].mxu0
    %v610 = vadd.f32 %v121, %v609
    %v611 = vpop.f32.mrb[0].mxu0
    %v612 = vpop.f32.mrb[0].mxu0
    %613 = vdwg.mxu0
    %v614 = vmax.f32 %v485, 0.0
    %v615 = vmax.f32 %v487, 0.0
    %v616 = vmax.f32 %v526, 0.0
    %v617 = vmax.f32 %v528, 0.0
    %v618 = vmax.f32 %v567, 0.0
    %v619 = vmax.f32 %v569, 0.0
    %v620 = vmax.f32 %v608, 0.0
    %v621 = vmax.f32 %v610, 0.0
    %v622 = vpack.c.bf16 %v614, %v614
    %v623 = vpack.c.bf16 %v615, %v615
    %v624 = vpack.c.bf16 %v616, %v616
    %v625 = vpack.c.bf16 %v617, %v617
    %v626 = vpack.c.bf16 %v618, %v618
    %v627 = vpack.c.bf16 %v619, %v619
    %v628 = vpack.c.bf16 %v620, %v620
    %v629 = vpack.c.bf16 %v621, %v621
    %v630 = vld [vmem:[%s3] sm:$0xf]
    %v631 = vld [vmem:[%s3 + $0x4] sm:$0xf]
    %v632 = vld [vmem:[%s3 + $0x8] sm:$0xf]
    %v633 = vld [vmem:[%s3 + $0xc] sm:$0xf]
    %v634 = vld [vmem:[%s3 + $0x10] sm:$0xf]
    %v635 = vld [vmem:[%s3 + $0x14] sm:$0xf]
    %v636 = vld [vmem:[%s3 + $0x18] sm:$0xf]
    %v637 = vld [vmem:[%s3 + $0x1c] sm:$0xf]
    %v638 = vld [vmem:[%s3 + $0x20] sm:$0xf]
    %v639 = vld [vmem:[%s3 + $0x24] sm:$0xf]
    %v640 = vld [vmem:[%s3 + $0x28] sm:$0xf]
    %v641 = vld [vmem:[%s3 + $0x2c] sm:$0xf]
    %v642 = vld [vmem:[%s3 + $0x30] sm:$0xf]
    %v643 = vld [vmem:[%s3 + $0x34] sm:$0xf]
    %v644 = vld [vmem:[%s3 + $0x38] sm:$0xf]
    %v645 = vld [vmem:[%s3 + $0x3c] sm:$0xf]
    %v646 = vld [vmem:[%s3 + $0x40] sm:$0xf]
    %v647 = vld [vmem:[%s3 + $0x44] sm:$0xf]
    %v648 = vld [vmem:[%s3 + $0x48] sm:$0xf]
    %v649 = vld [vmem:[%s3 + $0x4c] sm:$0xf]
    %v650 = vld [vmem:[%s3 + $0x50] sm:$0xf]
    %v651 = vld [vmem:[%s3 + $0x54] sm:$0xf]
    %v652 = vld [vmem:[%s3 + $0x58] sm:$0xf]
    %v653 = vld [vmem:[%s3 + $0x5c] sm:$0xf]
    %v654 = vld [vmem:[%s3 + $0x60] sm:$0xf]
    %v655 = vld [vmem:[%s3 + $0x64] sm:$0xf]
    %v656 = vld [vmem:[%s3 + $0x68] sm:$0xf]
    %v657 = vld [vmem:[%s3 + $0x6c] sm:$0xf]
    %v658 = vld [vmem:[%s3 + $0x70] sm:$0xf]
    %v659 = vld [vmem:[%s3 + $0x74] sm:$0xf]
    %v660 = vld [vmem:[%s3 + $0x78] sm:$0xf]
    %v661 = vld [vmem:[%s3 + $0x7c] sm:$0xf]
    %v662 = vld [vmem:[%s3 + $0x80] sm:$0xf]
    %v663 = vld [vmem:[%s3 + $0x84] sm:$0xf]
    %v664 = vld [vmem:[%s3 + $0x88] sm:$0xf]
    %v665 = vld [vmem:[%s3 + $0x8c] sm:$0xf]
    %v666 = vld [vmem:[%s3 + $0x90] sm:$0xf]
    %v667 = vld [vmem:[%s3 + $0x94] sm:$0xf]
    %v668 = vld [vmem:[%s3 + $0x98] sm:$0xf]
    %v669 = vld [vmem:[%s3 + $0x9c] sm:$0xf]
    %v670 = vld [vmem:[%s3 + $0xa0] sm:$0xf]
    %v671 = vld [vmem:[%s3 + $0xa4] sm:$0xf]
    %v672 = vld [vmem:[%s3 + $0xa8] sm:$0xf]
    %v673 = vld [vmem:[%s3 + $0xac] sm:$0xf]
    %v674 = vld [vmem:[%s3 + $0xb0] sm:$0xf]
    %v675 = vld [vmem:[%s3 + $0xb4] sm:$0xf]
    %v676 = vld [vmem:[%s3 + $0xb8] sm:$0xf]
    %v677 = vld [vmem:[%s3 + $0xbc] sm:$0xf]
    %v678 = vld [vmem:[%s3 + $0xc0] sm:$0xf]
    %v679 = vld [vmem:[%s3 + $0xc4] sm:$0xf]
    %v680 = vld [vmem:[%s3 + $0xc8] sm:$0xf]
    %v681 = vld [vmem:[%s3 + $0xcc] sm:$0xf]
    %v682 = vld [vmem:[%s3 + $0xd0] sm:$0xf]
    %v683 = vld [vmem:[%s3 + $0xd4] sm:$0xf]
    %v684 = vld [vmem:[%s3 + $0xd8] sm:$0xf]
    %v685 = vld [vmem:[%s3 + $0xdc] sm:$0xf]
    %v686 = vld [vmem:[%s3 + $0xe0] sm:$0xf]
    %v687 = vld [vmem:[%s3 + $0xe4] sm:$0xf]
    %v688 = vld [vmem:[%s3 + $0xe8] sm:$0xf]
    %v689 = vld [vmem:[%s3 + $0xec] sm:$0xf]
    %v690 = vld [vmem:[%s3 + $0xf0] sm:$0xf]
    %v691 = vld [vmem:[%s3 + $0xf4] sm:$0xf]
    %v692 = vld [vmem:[%s3 + $0xf8] sm:$0xf]
    %v693 = vld [vmem:[%s3 + $0xfc] sm:$0xf]
    %v694 = vld [vmem:[%s3 + $0x100] sm:$0xf]
    %v695 = vld [vmem:[%s3 + $0x104] sm:$0xf]
    %v696 = vld [vmem:[%s3 + $0x108] sm:$0xf]
    %v697 = vld [vmem:[%s3 + $0x10c] sm:$0xf]
    %v698 = vld [vmem:[%s3 + $0x110] sm:$0xf]
    %v699 = vld [vmem:[%s3 + $0x114] sm:$0xf]
    %v700 = vld [vmem:[%s3 + $0x118] sm:$0xf]
    %v701 = vld [vmem:[%s3 + $0x11c] sm:$0xf]
    %v702 = vld [vmem:[%s3 + $0x120] sm:$0xf]
    %v703 = vld [vmem:[%s3 + $0x124] sm:$0xf]
    %v704 = vld [vmem:[%s3 + $0x128] sm:$0xf]
    %v705 = vld [vmem:[%s3 + $0x12c] sm:$0xf]
    %v706 = vld [vmem:[%s3 + $0x130] sm:$0xf]
    %v707 = vld [vmem:[%s3 + $0x134] sm:$0xf]
    %v708 = vld [vmem:[%s3 + $0x138] sm:$0xf]
    %v709 = vld [vmem:[%s3 + $0x13c] sm:$0xf]
    %v710 = vld [vmem:[%s3 + $0x140] sm:$0xf]
    %v711 = vld [vmem:[%s3 + $0x144] sm:$0xf]
    %v712 = vld [vmem:[%s3 + $0x148] sm:$0xf]
    %v713 = vld [vmem:[%s3 + $0x14c] sm:$0xf]
    %v714 = vld [vmem:[%s3 + $0x150] sm:$0xf]
    %v715 = vld [vmem:[%s3 + $0x154] sm:$0xf]
    %v716 = vld [vmem:[%s3 + $0x158] sm:$0xf]
    %v717 = vld [vmem:[%s3 + $0x15c] sm:$0xf]
    %v718 = vld [vmem:[%s3 + $0x160] sm:$0xf]
    %v719 = vld [vmem:[%s3 + $0x164] sm:$0xf]
    %v720 = vld [vmem:[%s3 + $0x168] sm:$0xf]
    %v721 = vld [vmem:[%s3 + $0x16c] sm:$0xf]
    %v722 = vld [vmem:[%s3 + $0x170] sm:$0xf]
    %v723 = vld [vmem:[%s3 + $0x174] sm:$0xf]
    %v724 = vld [vmem:[%s3 + $0x178] sm:$0xf]
    %v725 = vld [vmem:[%s3 + $0x17c] sm:$0xf]
    %v726 = vld [vmem:[%s3 + $0x180] sm:$0xf]
    %v727 = vld [vmem:[%s3 + $0x184] sm:$0xf]
    %v728 = vld [vmem:[%s3 + $0x188] sm:$0xf]
    %v729 = vld [vmem:[%s3 + $0x18c] sm:$0xf]
    %v730 = vld [vmem:[%s3 + $0x190] sm:$0xf]
    %v731 = vld [vmem:[%s3 + $0x194] sm:$0xf]
    %v732 = vld [vmem:[%s3 + $0x198] sm:$0xf]
    %v733 = vld [vmem:[%s3 + $0x19c] sm:$0xf]
    %v734 = vld [vmem:[%s3 + $0x1a0] sm:$0xf]
    %v735 = vld [vmem:[%s3 + $0x1a4] sm:$0xf]
    %v736 = vld [vmem:[%s3 + $0x1a8] sm:$0xf]
    %v737 = vld [vmem:[%s3 + $0x1ac] sm:$0xf]
    %v738 = vld [vmem:[%s3 + $0x1b0] sm:$0xf]
    %v739 = vld [vmem:[%s3 + $0x1b4] sm:$0xf]
    %v740 = vld [vmem:[%s3 + $0x1b8] sm:$0xf]
    %v741 = vld [vmem:[%s3 + $0x1bc] sm:$0xf]
    %v742 = vld [vmem:[%s3 + $0x1c0] sm:$0xf]
    %v743 = vld [vmem:[%s3 + $0x1c4] sm:$0xf]
    %v744 = vld [vmem:[%s3 + $0x1c8] sm:$0xf]
    %v745 = vld [vmem:[%s3 + $0x1cc] sm:$0xf]
    %v746 = vld [vmem:[%s3 + $0x1d0] sm:$0xf]
    %v747 = vld [vmem:[%s3 + $0x1d4] sm:$0xf]
    %v748 = vld [vmem:[%s3 + $0x1d8] sm:$0xf]
    %v749 = vld [vmem:[%s3 + $0x1dc] sm:$0xf]
    %v750 = vld [vmem:[%s3 + $0x1e0] sm:$0xf]
    %v751 = vld [vmem:[%s3 + $0x1e4] sm:$0xf]
    %v752 = vld [vmem:[%s3 + $0x1e8] sm:$0xf]
    %v753 = vld [vmem:[%s3 + $0x1ec] sm:$0xf]
    %v754 = vld [vmem:[%s3 + $0x1f0] sm:$0xf]
    %v755 = vld [vmem:[%s3 + $0x1f4] sm:$0xf]
    %v756 = vld [vmem:[%s3 + $0x1f8] sm:$0xf]
    %v757 = vld [vmem:[%s3 + $0x1fc] sm:$0xf]
    %v758 = vld [vmem:[%s4] sm:$0x1]
    %v760 = vlaneseq
    %v761 = vshrl.u32 %v760, 7
    %v762 = vsub.s32 0, %v761
    %v763 = vrot.slane %v758, %v762
    %v893 = vunpack.c.l.b16 %v630
    %v894 = vunpack.c.l.b16 %v631
    %v895 = vunpack.c.l.b16 %v632
    %v896 = vunpack.c.l.b16 %v633
    %v897 = vunpack.c.l.b16 %v634
    %v898 = vunpack.c.l.b16 %v635
    %v899 = vunpack.c.l.b16 %v636
    %v900 = vunpack.c.l.b16 %v637
    %v901 = vunpack.c.l.b16 %v638
    %v902 = vunpack.c.l.b16 %v639
    %v903 = vunpack.c.l.b16 %v640
    %v904 = vunpack.c.l.b16 %v641
    %v905 = vunpack.c.l.b16 %v642
    %v906 = vunpack.c.l.b16 %v643
    %v907 = vunpack.c.l.b16 %v644
    %v908 = vunpack.c.l.b16 %v645
    %v909 = vunpack.c.l.b16 %v646
    %v910 = vunpack.c.l.b16 %v647
    %v911 = vunpack.c.l.b16 %v648
    %v912 = vunpack.c.l.b16 %v649
    %v913 = vunpack.c.l.b16 %v650
    %v914 = vunpack.c.l.b16 %v651
    %v915 = vunpack.c.l.b16 %v652
    %v916 = vunpack.c.l.b16 %v653
    %v917 = vunpack.c.l.b16 %v654
    %v918 = vunpack.c.l.b16 %v655
    %v919 = vunpack.c.l.b16 %v656
    %v920 = vunpack.c.l.b16 %v657
    %v921 = vunpack.c.l.b16 %v658
    %v922 = vunpack.c.l.b16 %v659
    %v923 = vunpack.c.l.b16 %v660
    %v924 = vunpack.c.l.b16 %v661
    %v925 = vunpack.c.l.b16 %v662
    %v926 = vunpack.c.l.b16 %v663
    %v927 = vunpack.c.l.b16 %v664
    %v928 = vunpack.c.l.b16 %v665
    %v929 = vunpack.c.l.b16 %v666
    %v930 = vunpack.c.l.b16 %v667
    %v931 = vunpack.c.l.b16 %v668
    %v932 = vunpack.c.l.b16 %v669
    %v933 = vunpack.c.l.b16 %v670
    %v934 = vunpack.c.l.b16 %v671
    %v935 = vunpack.c.l.b16 %v672
    %v936 = vunpack.c.l.b16 %v673
    %v937 = vunpack.c.l.b16 %v674
    %v938 = vunpack.c.l.b16 %v675
    %v939 = vunpack.c.l.b16 %v676
    %v940 = vunpack.c.l.b16 %v677
    %v941 = vunpack.c.l.b16 %v678
    %v942 = vunpack.c.l.b16 %v679
    %v943 = vunpack.c.l.b16 %v680
    %v944 = vunpack.c.l.b16 %v681
    %v945 = vunpack.c.l.b16 %v682
    %v946 = vunpack.c.l.b16 %v683
    %v947 = vunpack.c.l.b16 %v684
    %v948 = vunpack.c.l.b16 %v685
    %v949 = vunpack.c.l.b16 %v686
    %v950 = vunpack.c.l.b16 %v687
    %v951 = vunpack.c.l.b16 %v688
    %v952 = vunpack.c.l.b16 %v689
    %v953 = vunpack.c.l.b16 %v690
    %v954 = vunpack.c.l.b16 %v691
    %v955 = vunpack.c.l.b16 %v692
    %v956 = vunpack.c.l.b16 %v693
    %v957 = vunpack.c.l.b16 %v694
    %v958 = vunpack.c.l.b16 %v695
    %v959 = vunpack.c.l.b16 %v696
    %v960 = vunpack.c.l.b16 %v697
    %v961 = vunpack.c.l.b16 %v698
    %v962 = vunpack.c.l.b16 %v699
    %v963 = vunpack.c.l.b16 %v700
    %v964 = vunpack.c.l.b16 %v701
    %v965 = vunpack.c.l.b16 %v702
    %v966 = vunpack.c.l.b16 %v703
    %v967 = vunpack.c.l.b16 %v704
    %v968 = vunpack.c.l.b16 %v705
    %v969 = vunpack.c.l.b16 %v706
    %v970 = vunpack.c.l.b16 %v707
    %v971 = vunpack.c.l.b16 %v708
    %v972 = vunpack.c.l.b16 %v709
    %v973 = vunpack.c.l.b16 %v710
    %v974 = vunpack.c.l.b16 %v711
    %v975 = vunpack.c.l.b16 %v712
    %v976 = vunpack.c.l.b16 %v713
    %v977 = vunpack.c.l.b16 %v714
    %v978 = vunpack.c.l.b16 %v715
    %v979 = vunpack.c.l.b16 %v716
    %v980 = vunpack.c.l.b16 %v717
    %v981 = vunpack.c.l.b16 %v718
    %v982 = vunpack.c.l.b16 %v719
    %v983 = vunpack.c.l.b16 %v720
    %v984 = vunpack.c.l.b16 %v721
    %v985 = vunpack.c.l.b16 %v722
    %v986 = vunpack.c.l.b16 %v723
    %v987 = vunpack.c.l.b16 %v724
    %v988 = vunpack.c.l.b16 %v725
    %v989 = vunpack.c.l.b16 %v726
    %v990 = vunpack.c.l.b16 %v727
    %v991 = vunpack.c.l.b16 %v728
    %v992 = vunpack.c.l.b16 %v729
    %v993 = vunpack.c.l.b16 %v730
    %v994 = vunpack.c.l.b16 %v731
    %v995 = vunpack.c.l.b16 %v732
    %v996 = vunpack.c.l.b16 %v733
    %v997 = vunpack.c.l.b16 %v734
    %v998 = vunpack.c.l.b16 %v735
    %v999 = vunpack.c.l.b16 %v736
    %v1000 = vunpack.c.l.b16 %v737
    %v1001 = vunpack.c.l.b16 %v738
    %v1002 = vunpack.c.l.b16 %v739
    %v1003 = vunpack.c.l.b16 %v740
    %v1004 = vunpack.c.l.b16 %v741
    %v1005 = vunpack.c.l.b16 %v742
    %v1006 = vunpack.c.l.b16 %v743
    %v1007 = vunpack.c.l.b16 %v744
    %v1008 = vunpack.c.l.b16 %v745
    %v1009 = vunpack.c.l.b16 %v746
    %v1010 = vunpack.c.l.b16 %v747
    %v1011 = vunpack.c.l.b16 %v748
    %v1012 = vunpack.c.l.b16 %v749
    %v1013 = vunpack.c.l.b16 %v750
    %v1014 = vunpack.c.l.b16 %v751
    %v1015 = vunpack.c.l.b16 %v752
    %v1016 = vunpack.c.l.b16 %v753
    %v1017 = vunpack.c.l.b16 %v754
    %v1018 = vunpack.c.l.b16 %v755
    %v1019 = vunpack.c.l.b16 %v756
    %v1020 = vunpack.c.l.b16 %v757
    %v1021 = vpack.c.b16 %v894, %v893
    %v1022 = vpack.c.b16 %v896, %v895
    %v1023 = vpack.c.b16 %v898, %v897
    %v1024 = vpack.c.b16 %v900, %v899
    %v1025 = vpack.c.b16 %v902, %v901
    %v1026 = vpack.c.b16 %v904, %v903
    %v1027 = vpack.c.b16 %v906, %v905
    %v1028 = vpack.c.b16 %v908, %v907
    %v1029 = vpack.c.b16 %v910, %v909
    %v1030 = vpack.c.b16 %v912, %v911
    %v1031 = vpack.c.b16 %v914, %v913
    %v1032 = vpack.c.b16 %v916, %v915
    %v1033 = vpack.c.b16 %v918, %v917
    %v1034 = vpack.c.b16 %v920, %v919
    %v1035 = vpack.c.b16 %v922, %v921
    %v1036 = vpack.c.b16 %v924, %v923
    %v1037 = vpack.c.b16 %v926, %v925
    %v1038 = vpack.c.b16 %v928, %v927
    %v1039 = vpack.c.b16 %v930, %v929
    %v1040 = vpack.c.b16 %v932, %v931
    %v1041 = vpack.c.b16 %v934, %v933
    %v1042 = vpack.c.b16 %v936, %v935
    %v1043 = vpack.c.b16 %v938, %v937
    %v1044 = vpack.c.b16 %v940, %v939
    %v1045 = vpack.c.b16 %v942, %v941
    %v1046 = vpack.c.b16 %v944, %v943
    %v1047 = vpack.c.b16 %v946, %v945
    %v1048 = vpack.c.b16 %v948, %v947
    %v1049 = vpack.c.b16 %v950, %v949
    %v1050 = vpack.c.b16 %v952, %v951
    %v1051 = vpack.c.b16 %v954, %v953
    %v1052 = vpack.c.b16 %v956, %v955
    %v1053 = vpack.c.b16 %v958, %v957
    %v1054 = vpack.c.b16 %v960, %v959
    %v1055 = vpack.c.b16 %v962, %v961
    %v1056 = vpack.c.b16 %v964, %v963
    %v1057 = vpack.c.b16 %v966, %v965
    %v1058 = vpack.c.b16 %v968, %v967
    %v1059 = vpack.c.b16 %v970, %v969
    %v1060 = vpack.c.b16 %v972, %v971
    %v1061 = vpack.c.b16 %v974, %v973
    %v1062 = vpack.c.b16 %v976, %v975
    %v1063 = vpack.c.b16 %v978, %v977
    %v1064 = vpack.c.b16 %v980, %v979
    %v1065 = vpack.c.b16 %v982, %v981
    %v1066 = vpack.c.b16 %v984, %v983
    %v1067 = vpack.c.b16 %v986, %v985
    %v1068 = vpack.c.b16 %v988, %v987
    %v1069 = vpack.c.b16 %v990, %v989
    %v1070 = vpack.c.b16 %v992, %v991
    %v1071 = vpack.c.b16 %v994, %v993
    %v1072 = vpack.c.b16 %v996, %v995
    %v1073 = vpack.c.b16 %v998, %v997
    %v1074 = vpack.c.b16 %v1000, %v999
    %v1075 = vpack.c.b16 %v1002, %v1001
    %v1076 = vpack.c.b16 %v1004, %v1003
    %v1077 = vpack.c.b16 %v1006, %v1005
    %v1078 = vpack.c.b16 %v1008, %v1007
    %v1079 = vpack.c.b16 %v1010, %v1009
    %v1080 = vpack.c.b16 %v1012, %v1011
    %v1081 = vpack.c.b16 %v1014, %v1013
    %v1082 = vpack.c.b16 %v1016, %v1015
    %v1083 = vpack.c.b16 %v1018, %v1017
    %v1084 = vpack.c.b16 %v1020, %v1019
    %1149 = vmatprep.subr.bf16.mxu0 0
    %1150 = vmatpush1.bf16.msra.mxu0 %v1021
    %1151 = vmatprep.subr.bf16.mxu0 0
    %1152 = vmatpush1.bf16.msra.mxu0 %v1022
    %1153 = vmatprep.subr.bf16.mxu0 0
    %1154 = vmatpush1.bf16.msra.mxu0 %v1023
    %1155 = vmatprep.subr.bf16.mxu0 0
    %1156 = vmatpush1.bf16.msra.mxu0 %v1024
    %1157 = vmatprep.subr.bf16.mxu0 0
    %1158 = vmatpush1.bf16.msra.mxu0 %v1025
    %1159 = vmatprep.subr.bf16.mxu0 0
    %1160 = vmatpush1.bf16.msra.mxu0 %v1026
    %1161 = vmatprep.subr.bf16.mxu0 0
    %1162 = vmatpush1.bf16.msra.mxu0 %v1027
    %1163 = vmatprep.subr.bf16.mxu0 0
    %1164 = vmatpush1.bf16.msra.mxu0 %v1028
    %1165 = vmatprep.subr.bf16.mxu0 0
    %1166 = vmatpush1.bf16.msra.mxu0 %v1029
    %1167 = vmatprep.subr.bf16.mxu0 0
    %1168 = vmatpush1.bf16.msra.mxu0 %v1030
    %1169 = vmatprep.subr.bf16.mxu0 0
    %1170 = vmatpush1.bf16.msra.mxu0 %v1031
    %1171 = vmatprep.subr.bf16.mxu0 0
    %1172 = vmatpush1.bf16.msra.mxu0 %v1032
    %1173 = vmatprep.subr.bf16.mxu0 0
    %1174 = vmatpush1.bf16.msra.mxu0 %v1033
    %1175 = vmatprep.subr.bf16.mxu0 0
    %1176 = vmatpush1.bf16.msra.mxu0 %v1034
    %1177 = vmatprep.subr.bf16.mxu0 0
    %1178 = vmatpush1.bf16.msra.mxu0 %v1035
    %1179 = vmatprep.subr.bf16.mxu0 0
    %1180 = vmatpush1.bf16.msra.mxu0 %v1036
    %1181 = vmatprep.mubr.bf16.mxu0 %v623
    %1182 = vmatmul.mubr.bf16.gmra.mrb[0].mxu0 %v622
    %v1183 = vpop.f32.mrb[0].mxu0
    %v1184 = vadd.f32 %v763, %v1183
    %v1185 = vpop.f32.mrb[0].mxu0
    %v1186 = vpop.f32.mrb[0].mxu0
    %v1187 = vpop.f32.mrb[0].mxu0
    %1188 = vdwg.mxu0
    %1189 = vmatprep.subr.bf16.mxu0 0
    %1190 = vmatpush1.bf16.msra.mxu0 %v1037
    %1191 = vmatprep.subr.bf16.mxu0 0
    %1192 = vmatpush1.bf16.msra.mxu0 %v1038
    %1193 = vmatprep.subr.bf16.mxu0 0
    %1194 = vmatpush1.bf16.msra.mxu0 %v1039
    %1195 = vmatprep.subr.bf16.mxu0 0
    %1196 = vmatpush1.bf16.msra.mxu0 %v1040
    %1197 = vmatprep.subr.bf16.mxu0 0
    %1198 = vmatpush1.bf16.msra.mxu0 %v1041
    %1199 = vmatprep.subr.bf16.mxu0 0
    %1200 = vmatpush1.bf16.msra.mxu0 %v1042
    %1201 = vmatprep.subr.bf16.mxu0 0
    %1202 = vmatpush1.bf16.msra.mxu0 %v1043
    %1203 = vmatprep.subr.bf16.mxu0 0
    %1204 = vmatpush1.bf16.msra.mxu0 %v1044
    %1205 = vmatprep.subr.bf16.mxu0 0
    %1206 = vmatpush1.bf16.msra.mxu0 %v1045
    %1207 = vmatprep.subr.bf16.mxu0 0
    %1208 = vmatpush1.bf16.msra.mxu0 %v1046
    %1209 = vmatprep.subr.bf16.mxu0 0
    %1210 = vmatpush1.bf16.msra.mxu0 %v1047
    %1211 = vmatprep.subr.bf16.mxu0 0
    %1212 = vmatpush1.bf16.msra.mxu0 %v1048
    %1213 = vmatprep.subr.bf16.mxu0 0
    %1214 = vmatpush1.bf16.msra.mxu0 %v1049
    %1215 = vmatprep.subr.bf16.mxu0 0
    %1216 = vmatpush1.bf16.msra.mxu0 %v1050
    %1217 = vmatprep.subr.bf16.mxu0 0
    %1218 = vmatpush1.bf16.msra.mxu0 %v1051
    %1219 = vmatprep.subr.bf16.mxu0 0
    %1220 = vmatpush1.bf16.msra.mxu0 %v1052
    %1221 = vmatprep.mubr.bf16.mxu0 %v625
    %1222 = vmatmul.mubr.bf16.gmra.mrb[0].mxu0 %v624
    %v1223 = vpop.f32.mrb[0].mxu0
    %v1224 = vadd.f32 %v1184, %v1223
    %v1225 = vpop.f32.mrb[0].mxu0
    %v1226 = vpop.f32.mrb[0].mxu0
    %v1227 = vpop.f32.mrb[0].mxu0
    %1228 = vdwg.mxu0
    %1229 = vmatprep.subr.bf16.mxu0 0
    %1230 = vmatpush1.bf16.msra.mxu0 %v1053
    %1231 = vmatprep.subr.bf16.mxu0 0
    %1232 = vmatpush1.bf16.msra.mxu0 %v1054
    %1233 = vmatprep.subr.bf16.mxu0 0
    %1234 = vmatpush1.bf16.msra.mxu0 %v1055
    %1235 = vmatprep.subr.bf16.mxu0 0
    %1236 = vmatpush1.bf16.msra.mxu0 %v1056
    %1237 = vmatprep.subr.bf16.mxu0 0
    %1238 = vmatpush1.bf16.msra.mxu0 %v1057
    %1239 = vmatprep.subr.bf16.mxu0 0
    %1240 = vmatpush1.bf16.msra.mxu0 %v1058
    %1241 = vmatprep.subr.bf16.mxu0 0
    %1242 = vmatpush1.bf16.msra.mxu0 %v1059
    %1243 = vmatprep.subr.bf16.mxu0 0
    %1244 = vmatpush1.bf16.msra.mxu0 %v1060
    %1245 = vmatprep.subr.bf16.mxu0 0
    %1246 = vmatpush1.bf16.msra.mxu0 %v1061
    %1247 = vmatprep.subr.bf16.mxu0 0
    %1248 = vmatpush1.bf16.msra.mxu0 %v1062
    %1249 = vmatprep.subr.bf16.mxu0 0
    %1250 = vmatpush1.bf16.msra.mxu0 %v1063
    %1251 = vmatprep.subr.bf16.mxu0 0
    %1252 = vmatpush1.bf16.msra.mxu0 %v1064
    %1253 = vmatprep.subr.bf16.mxu0 0
    %1254 = vmatpush1.bf16.msra.mxu0 %v1065
    %1255 = vmatprep.subr.bf16.mxu0 0
    %1256 = vmatpush1.bf16.msra.mxu0 %v1066
    %1257 = vmatprep.subr.bf16.mxu0 0
    %1258 = vmatpush1.bf16.msra.mxu0 %v1067
    %1259 = vmatprep.subr.bf16.mxu0 0
    %1260 = vmatpush1.bf16.msra.mxu0 %v1068
    %1261 = vmatprep.mubr.bf16.mxu0 %v627
    %1262 = vmatmul.mubr.bf16.gmra.mrb[0].mxu0 %v626
    %v1263 = vpop.f32.mrb[0].mxu0
    %v1264 = vadd.f32 %v1224, %v1263
    %v1265 = vpop.f32.mrb[0].mxu0
    %v1266 = vpop.f32.mrb[0].mxu0
    %v1267 = vpop.f32.mrb[0].mxu0
    %1268 = vdwg.mxu0
    %1269 = vmatprep.subr.bf16.mxu0 0
    %1270 = vmatpush1.bf16.msra.mxu0 %v1069
    %1271 = vmatprep.subr.bf16.mxu0 0
    %1272 = vmatpush1.bf16.msra.mxu0 %v1070
    %1273 = vmatprep.subr.bf16.mxu0 0
    %1274 = vmatpush1.bf16.msra.mxu0 %v1071
    %1275 = vmatprep.subr.bf16.mxu0 0
    %1276 = vmatpush1.bf16.msra.mxu0 %v1072
    %1277 = vmatprep.subr.bf16.mxu0 0
    %1278 = vmatpush1.bf16.msra.mxu0 %v1073
    %1279 = vmatprep.subr.bf16.mxu0 0
    %1280 = vmatpush1.bf16.msra.mxu0 %v1074
    %1281 = vmatprep.subr.bf16.mxu0 0
    %1282 = vmatpush1.bf16.msra.mxu0 %v1075
    %1283 = vmatprep.subr.bf16.mxu0 0
    %1284 = vmatpush1.bf16.msra.mxu0 %v1076
    %1285 = vmatprep.subr.bf16.mxu0 0
    %1286 = vmatpush1.bf16.msra.mxu0 %v1077
    %1287 = vmatprep.subr.bf16.mxu0 0
    %1288 = vmatpush1.bf16.msra.mxu0 %v1078
    %1289 = vmatprep.subr.bf16.mxu0 0
    %1290 = vmatpush1.bf16.msra.mxu0 %v1079
    %1291 = vmatprep.subr.bf16.mxu0 0
    %1292 = vmatpush1.bf16.msra.mxu0 %v1080
    %1293 = vmatprep.subr.bf16.mxu0 0
    %1294 = vmatpush1.bf16.msra.mxu0 %v1081
    %1295 = vmatprep.subr.bf16.mxu0 0
    %1296 = vmatpush1.bf16.msra.mxu0 %v1082
    %1297 = vmatprep.subr.bf16.mxu0 0
    %1298 = vmatpush1.bf16.msra.mxu0 %v1083
    %1299 = vmatprep.subr.bf16.mxu0 0
    %1300 = vmatpush1.bf16.msra.mxu0 %v1084
    %1301 = vmatprep.mubr.bf16.mxu0 %v629
    %1302 = vmatmul.mubr.bf16.gmra.mrb[0].mxu0 %v628
    %v1303 = vpop.f32.mrb[0].mxu0
    %v1304 = vadd.f32 %v1264, %v1303
    %v1305 = vpop.f32.mrb[0].mxu0
    %v1306 = vpop.f32.mrb[0].mxu0
    %v1307 = vpop.f32.mrb[0].mxu0
    %1308 = vdwg.mxu0
    %1309 = vmax.xlane.f32.xlu0 %v1304
    %v1310 = vpop.xlane.xlu0 %1309
    %v1311 = vsub.f32 %v1304, %v1310
    %v1312 = vmul.f32 %v1311, 1.442695
    %v1313 = vpow.pop %v1312
    %1314 = vadd.xlane.f32.xlu0 %v1313
    %v1315 = vpop.xlane.xlu0 %1314
    %v1316 = vlog2.pop %v1315
    %v1317 = vmul.f32 %v1316, 0.6931472
    %v1318 = vsub.f32 %v1311, %v1317
    %1319 = vst [vmem:[#allocation2] sm:$0xff] %v1318
    // Predicated region
    $region22: #{adaptive_layer.1} parent=1 // pred_check
      _
    $region23: #{adaptive_layer.1} parent=1 // pred_check_branch
      %1321 = sbr.rel (0) target = $region25
    $region24: #{adaptive_layer.1} parent=1 // pred_region
      %s1323 = ssub.s32 128, 128
      %1324 = vsyncadd [#allocation3], %s1323
      %s1326 = sshll.u32 [#allocation2], 4
      %s1327 = int_to_ptr.vmem [resolvable:$true] %s1326
      %1329 = dma.vmem_to_hbm [thread:$0]  %s1327, 128, %s5, [#allocation3]
    $region25: #{adaptive_layer.1} parent=1 // pred_fallthru
      _
    // Predicated region
    $region26: #{adaptive_layer.1} parent=1 // pred_check
      _
    $region27: #{adaptive_layer.1} parent=1 // pred_check_branch
      %1331 = sbr.rel (0) target = $region29
    $region28: #{adaptive_layer.1} parent=1 // pred_region
      %1332 = dma.done [#allocation3], 128
    $region29: #{adaptive_layer.1} parent=1 // pred_fallthru
      _
    %1333 = vsyncpa [#allocation3], 1

</llo_original>
